<compile_context>
chip_gen: v7x
topology: tpu7x:2x2x1
jax: 0.10.0
libtpu: 0.0.40
codegen_flags: <defaults>
</compile_context>

<pallas_src>
import functools

import jax
import jax.numpy as jnp
from jax import lax
from jax.experimental import pallas as pl
from jax.experimental.pallas import tpu as pltpu


def _round_up(v, m):
    return (v + m - 1) // m * m


def _vmem_limit_bytes():
    """Per-generation scoped VMEM limit (v7x has 64 MiB/TC, v5e/v6e 128 MiB)."""
    try:
        kind = jax.devices()[0].device_kind.lower()
    except Exception:
        kind = ""
    if "v7" in kind or "7x" in kind:
        return 48 * 1024 * 1024
    return 100 * 1024 * 1024


# ---------------------------------------------------------------------------
# Generic fused stack of 3x3 / stride-1 / SAME convolutions (Pallas kernel)
# ---------------------------------------------------------------------------

def _conv_stack_kernel(x_ref, *refs, nstage, relus, merge, halo, tb, rt,
                       himg, wimg, w_outs, pack, compute_dtype):
    """One row-tile of a fused chain of 3x3 SAME convolutions.

    x_ref : (1, tb + 2*halo, w_outs[0] + 2, Cin)  zero-padded input window
    refs  : w_0..w_{n-1} (9*Cin_s, Cout_s), b_0..b_{n-1} (1, Cout_s), o_ref
    o_ref : (1, tb, w_last // pack, Cout_last * pack)   (lane-dense packing)
    """
    w_refs = refs[:nstage]
    b_refs = refs[nstage:2 * nstage]
    o_ref = refs[2 * nstage]

    # Row-tile index inside the image (grid axis enumerates batch * row_tiles).
    r = pl.program_id(0) % rt
    row0 = r * tb

    t = x_ref[0]                                            # (hin, win, cin)
    for s in range(nstage):
        hin = t.shape[0]
        cin = t.shape[2]
        ho = hin - 2
        wo = w_outs[s]                                      # multiple of 16
        cout = w_refs[s].shape[-1]

        # im2col along W (3 sublane-shifted slices), reused by all dy taps:
        # (hin, wo, 3*cin) with channel order (dx, cin).
        tx = jnp.concatenate([t[:, dx:dx + wo] for dx in range(3)], axis=-1)

        if merge[s]:
            # One fat-K MXU matmul (K = 9*cin): 3x fewer vmatmul pushes /
            # result pops than three K=3*cin matmuls and 2 fewer f32 adds.
            t9 = jnp.concatenate([tx[dy:dy + ho] for dy in range(3)], axis=-1)
            acc = jnp.dot(t9.reshape(ho * wo, 9 * cin), w_refs[s][...],
                          preferred_element_type=jnp.float32)
        else:
            # Bounded-VMEM fallback (very wide images / v7x): 3 K=3*cin
            # matmuls re-using the shared dx-im2col buffer.
            acc = jnp.dot(tx[0:ho].reshape(ho * wo, 3 * cin),
                          w_refs[s][0:3 * cin, :],
                          preferred_element_type=jnp.float32)
            for dy in range(1, 3):
                acc = acc + jnp.dot(
                    tx[dy:dy + ho].reshape(ho * wo, 3 * cin),
                    w_refs[s][dy * 3 * cin:(dy + 1) * 3 * cin, :],
                    preferred_element_type=jnp.float32)

        acc = acc + b_refs[s][...]
        if relus[s]:
            acc = jnp.maximum(acc, 0.0)

        if s + 1 < nstage:
            out = acc.reshape(ho, wo, cout)
            # Re-zero the out-of-image halo so the next fused stage sees the
            # zeros its SAME padding would have supplied.  Built from 1-D
            # row/col validity vectors (outer product) to keep VALU work low.
            off = halo - 1 - s
            gi = lax.broadcasted_iota(jnp.int32, (ho, 1), 0) + (row0 - off)
            gj = lax.broadcasted_iota(jnp.int32, (1, wo), 1) - off
            valid = (gi >= 0) & (gi < himg) & (gj >= 0) & (gj < wimg)
            out = jnp.where(valid[:, :, None], out, 0.0)
            t = out.astype(compute_dtype)
        else:
            # Lane-dense store: fold `pack` consecutive W positions x cout
            # channels into the lane dim (cout*pack >= 128) so the output DMA
            # uses unmasked full-lane stores instead of vst.msk partials.
            o_ref[0] = acc.astype(o_ref.dtype).reshape(
                tb, wo // pack, cout * pack)


def conv_stack(x, stages, *, block_rows=32, out_dtype=None,
               compute_dtype=jnp.bfloat16,
               dy_merge_budget=24 * 1024 * 1024):
    """Fused chain of 3x3 stride-1 SAME convolutions as one pallas_call.

    x      : (N, H, W, Cin)
    stages : sequence of (w, b, relu) with w: (9*Cin_s, Cout_s) im2col weights
             (tap order (dy, dx, cin)) and b: (Cout_s,) biases.
    Returns: (N, H, W, Cout_last)
    """
    n, himg, wimg, cin = x.shape
    nstage = len(stages)
    halo = nstage
    out_dtype = out_dtype or x.dtype

    ws, bs, relus, cins = [], [], [], []
    c = cin
    for (w, b, relu) in stages:
        assert w.shape[0] == 9 * c, (w.shape, c)
        ws.append(w.astype(compute_dtype))
        bs.append(jnp.asarray(b, jnp.float32).reshape(1, -1))
        relus.append(bool(relu))
        cins.append(c)
        c = w.shape[-1]
    cout = c

    # Row tiling (output rows per grid step) and width padding.  All per-stage
    # output widths are multiples of 16 so in-kernel (rows, W, C) <-> (rows*W,
    # C) reshapes stay tile-aligned for bf16 intermediates.
    tb = max(1, min(block_rows, himg))
    rt = pl.cdiv(himg, tb)
    rows_pad = rt * tb
    win_rows = tb + 2 * halo
    w_last = _round_up(wimg, 16)
    w_outs = tuple(w_last + 16 * (nstage - 1 - s) for s in range(nstage))
    wp = w_outs[0] + 2

    # Lane-dense packing factor for the final store (only when Cout < 128).
    pack = 1
    if cout < 128 and 128 % cout == 0 and w_last % (128 // cout) == 0:
        pack = 128 // cout

    # Per-stage choice: merge all 9 taps into one fat-K matmul only when the
    # 9-tap im2col buffer fits the VMEM budget (always true at small/medium W;
    # the fallback keeps very wide images within v7x's 64 MiB VMEM).
    merge = []
    for s in range(nstage):
        ho_s = tb + 2 * (nstage - 1 - s)
        t9_bytes = ho_s * w_outs[s] * 9 * cins[s] * 2
        merge.append(t9_bytes <= dy_merge_budget)
    merge = tuple(merge)

    # Zero-pad (SAME halo + alignment + bottom tiling remainder) and
    # materialize the overlapping row windows so the grid uses plain blocked
    # indexing with double-buffered auto-pipelining.  XLA fuses any upstream
    # transpose/concat with this pad+gather into one producer fusion.
    # TODO(synk): replace with manual double-buffered DMA row-window streaming
    # (pl.ANY + pltpu.make_async_copy) to drop the ~1.2x window duplication.
    xp = jnp.pad(x.astype(compute_dtype),
                 ((0, 0),
                  (halo, halo + rows_pad - himg),
                  (halo, wp - wimg - halo),
                  (0, 0)))
    idx = jnp.arange(rt)[:, None] * tb + jnp.arange(win_rows)[None, :]
    xw = xp[:, idx].reshape(n * rt, win_rows, wp, cin)

    kernel = functools.partial(
        _conv_stack_kernel, nstage=nstage, relus=tuple(relus), merge=merge,
        halo=halo, tb=tb, rt=rt, himg=himg, wimg=wimg, w_outs=w_outs,
        pack=pack, compute_dtype=compute_dtype)

    in_specs = [pl.BlockSpec((1, win_rows, wp, cin), lambda i: (i, 0, 0, 0))]
    in_specs += [pl.BlockSpec(w.shape, lambda i: (0, 0)) for w in ws]
    in_specs += [pl.BlockSpec(b.shape, lambda i: (0, 0)) for b in bs]

    out = pl.pallas_call(
        kernel,
        out_shape=jax.ShapeDtypeStruct(
            (n * rt, tb, w_last // pack, cout * pack), out_dtype),
        grid=(n * rt,),
        in_specs=in_specs,
        out_specs=pl.BlockSpec((1, tb, w_last // pack, cout * pack),
                               lambda i: (i, 0, 0, 0)),
        compiler_params=pltpu.CompilerParams(
            dimension_semantics=("parallel",),
            vmem_limit_bytes=_vmem_limit_bytes()),
    )(xw, *ws, *bs)

    # (w_last//pack, cout*pack) -> (w_last, cout) preserves flat order (free).
    return out.reshape(n, rows_pad, w_last, cout)[:, :himg, :wimg]


# ---------------------------------------------------------------------------
# Weight preparation
# ---------------------------------------------------------------------------

def _fold_deconv_weight(w):
    """ConvTranspose2d(Cin,Cout,k=8,s=4,p=2) weight (Cin,Cout,8,8) ->
    im2col weight (9*Cin, 16*Cout) of the equivalent low-res 3x3 SAME conv
    whose output channels carry the 4x4 sub-pixel phases (ry, rx, co)."""
    cin, cout = w.shape[0], w.shape[1]
    k = jnp.arange(4)[None, :] + 6 - 4 * jnp.arange(3)[:, None]   # (t, r)
    m = ((k >= 0) & (k < 8)).astype(w.dtype)
    kc = jnp.clip(k, 0, 7)
    wk = w[:, :, kc, :]                       # (ci, co, ty, ry, kx)
    wk = wk[:, :, :, :, kc]                   # (ci, co, ty, ry, tx, rx)
    wk = wk * m[None, None, :, :, None, None] * m[None, None, None, None, :, :]
    # -> (ty, tx, ci, ry, rx, co); folded channel = ry*4*cout + rx*cout + co
    wk = jnp.transpose(wk, (2, 4, 0, 3, 5, 1)).reshape(3, 3, cin, 16 * cout)
    return wk.reshape(9 * cin, 16 * cout)


def _im2col_weight(w_oihw):
    """PyTorch Conv2d weight (Cout, Cin, 3, 3) -> (9*Cin, Cout)."""
    w = jnp.transpose(w_oihw, (2, 3, 1, 0))   # HWIO
    return w.reshape(9 * w.shape[2], w.shape[3])


# ---------------------------------------------------------------------------
# Parameters (deterministic synthetic init mimicking variance_scaling)
# ---------------------------------------------------------------------------

def init_params(key):
    channel, spectral = 32, 8
    ks = jax.random.split(key, 4)

    def vs_init(k, shape):
        fan_in = shape[1] * shape[2] * shape[3]
        std = (1.0 / max(1.0, fan_in)) ** 0.5 / 0.8796256610342398
        w = jax.random.truncated_normal(k, -2.0, 2.0, shape, jnp.float32) * std
        return w / 10.0 * 1.28

    return {
        # ConvTranspose2d weight, PyTorch layout (Cin, Cout, kh, kw)
        "w_deconv": vs_init(ks[0], (spectral, spectral, 8, 8)),
        "b_deconv": jnp.zeros((spectral,), jnp.float32),
        # Conv2d weights, PyTorch layout (Cout, Cin, kh, kw)
        "w1": vs_init(ks[1], (channel, spectral + 1, 3, 3)),
        "b1": jnp.zeros((channel,), jnp.float32),
        "w2": vs_init(ks[2], (channel, channel, 3, 3)),
        "b2": jnp.zeros((channel,), jnp.float32),
        "w3": vs_init(ks[3], (spectral, channel, 3, 3)),
        "b3": jnp.zeros((spectral,), jnp.float32),
    }


# ---------------------------------------------------------------------------
# Forward pass
# ---------------------------------------------------------------------------

def _deconv_pallas(params, x_nhwc, *, block_rows=32,
                   compute_dtype=jnp.bfloat16):
    """ConvTranspose2d(8->8,k=8,s=4,p=2) via the phase-folded Pallas conv."""
    n, h, w, c = x_nhwc.shape
    w_dec = _fold_deconv_weight(params["w_deconv"])          # (72, 128)
    b_dec = jnp.tile(params["b_deconv"], 16)
    z = conv_stack(x_nhwc, [(w_dec, b_dec, False)],
                   block_rows=block_rows, out_dtype=compute_dtype,
                   compute_dtype=compute_dtype)              # (N, H, W, 128)
    # Pixel shuffle back to hi-res.  XLA fuses this with the downstream
    # concat + pad + window gather of the fused conv stack.
    d = z.reshape(n, h, w, 4, 4, c).transpose(0, 1, 3, 2, 4, 5)
    return d.reshape(n, 4 * h, 4 * w, c)                     # (N, 4H, 4W, 8)


def dicnn_forward(params, x_nchw, y_nchw, *, block_rows=32,
                  compute_dtype=jnp.bfloat16):
    """x: (N, 8, H, W), y: (N, 1, 4H, 4W) -> (N, 8, 4H, 4W), all NCHW."""
    x = jnp.transpose(x_nchw, (0, 2, 3, 1))                  # (N, H, W, 8)
    y = jnp.transpose(y_nchw, (0, 2, 3, 1))                  # (N, 4H, 4W, 1)

    # --- deconv: sub-pixel decomposition, lane-dense Cout = 128 ---
    d = _deconv_pallas(params, x, block_rows=block_rows,
                       compute_dtype=compute_dtype)

    # --- fused concat + conv1 + conv2 + conv3 (intermediates stay in VMEM) ---
    inp = jnp.concatenate([d, y.astype(compute_dtype)], axis=-1)   # 9 channels
    stages = [
        (_im2col_weight(params["w1"]), params["b1"], True),
        (_im2col_weight(params["w2"]), params["b2"], True),
        (_im2col_weight(params["w3"]), params["b3"], False),
    ]
    out = conv_stack(inp, stages, block_rows=block_rows,
                     out_dtype=x_nchw.dtype, compute_dtype=compute_dtype)
    return jnp.transpose(out, (0, 3, 1, 2))                  # back to NCHW


# ---------------------------------------------------------------------------
# Pure-JAX references
# ---------------------------------------------------------------------------

def _deconv_reference(params, x_nchw):
    w_dec_oihw = jnp.transpose(params["w_deconv"], (1, 0, 2, 3))[:, :, ::-1, ::-1]
    od = lax.conv_general_dilated(
        x_nchw, w_dec_oihw, (1, 1), [(5, 5), (5, 5)], lhs_dilation=(4, 4),
        dimension_numbers=("NCHW", "OIHW", "NCHW"))
    return od + params["b_deconv"][None, :, None, None]


def reference_forward(params, x_nchw, y_nchw):
    od = _deconv_reference(params, x_nchw)
    inp = jnp.concatenate([od, y_nchw], axis=1)

    def c3(t, w, b, relu):
        o = lax.conv_general_dilated(
            t, w, (1, 1), [(1, 1), (1, 1)],
            dimension_numbers=("NCHW", "OIHW", "NCHW"))
        o = o + b[None, :, None, None]
        return jnp.maximum(o, 0.0) if relu else o

    rs1 = c3(inp, params["w1"], params["b1"], True)
    rs = c3(rs1, params["w2"], params["b2"], True)
    return c3(rs, params["w3"], params["b3"], False)


if __name__ == "__main__":
    key = jax.random.PRNGKey(0)
    pk, xk, yk = jax.random.split(key, 3)
    params = init_params(pk)

    N, spectral, H, W = 2, 8, 8, 8
    x = jax.random.normal(xk, (N, spectral, H, W), jnp.float32)
    y = jax.random.normal(yk, (N, 1, 4 * H, 4 * W), jnp.float32)

    # Check the phase-folded deconv kernel against a lax transposed conv.
    d = jax.jit(lambda p, a: _deconv_pallas(
        p, jnp.transpose(a, (0, 2, 3, 1))))(params, x)
    d = jax.block_until_ready(d)
    d_ref = _deconv_reference(params, x)
    d_nchw = jnp.transpose(d, (0, 3, 1, 2)).astype(jnp.float32)
    derr = float(jnp.max(jnp.abs(d_nchw - d_ref)))
    dscale = float(jnp.max(jnp.abs(d_ref)))
    assert derr <= 0.03 * dscale + 1e-4, (derr, dscale)

    # Full forward.
    out = jax.jit(dicnn_forward)(params, x, y)
    out = jax.block_until_ready(out)
    assert out.shape == (N, spectral, 4 * H, 4 * W), out.shape

    ref = reference_forward(params, x, y)
    err = float(jnp.max(jnp.abs(out - ref)))
    scale = float(jnp.max(jnp.abs(ref)))
    assert err <= 0.05 * scale + 5e-5, (err, scale)
    print("KERNEL_OK")
</pallas_src>

<mosaic_0001>
module attributes {stable_mosaic.version = 11 : i64} {
  func.func @_conv_stack_kernel(%arg0: i32, %arg1: memref<1x10x18x8xbf16, #tpu.memory_space<vmem>>, %arg2: memref<72x128xbf16, #tpu.memory_space<vmem>>, %arg3: memref<1x128xf32, #tpu.memory_space<vmem>>, %arg4: memref<1x8x16x128xbf16, #tpu.memory_space<vmem>>) attributes {dimension_semantics = [#tpu.dimension_semantics<parallel>], iteration_bounds = array<i64: 2>, scalar_prefetch = 0 : i64, scratch_operands = 0 : i64, tpu.core_type = #tpu.core_type<tc>, window_params = [{transform_indices = @transform_0, window_bounds = array<i64: 1, 10, 18, 8>}, {pipeline_mode = #tpu.pipeline_mode<synchronous>, transform_indices = @transform_1, window_bounds = array<i64: 72, 128>}, {pipeline_mode = #tpu.pipeline_mode<synchronous>, transform_indices = @transform_2, window_bounds = array<i64: 1, 128>}, {transform_indices = @transform_3, window_bounds = array<i64: 1, 8, 16, 128>}]} {
    %c0 = arith.constant 0 : index
    %c0_0 = arith.constant 0 : index
    %c0_1 = arith.constant 0 : index
    %c0_2 = arith.constant 0 : index
    %0 = vector.load %arg1[%c0, %c0_0, %c0_1, %c0_2] : memref<1x10x18x8xbf16, #tpu.memory_space<vmem>>, vector<1x10x18x8xbf16>
    %1 = vector.shape_cast %0 : vector<1x10x18x8xbf16> to vector<10x18x8xbf16>
    %2 = vector.extract_strided_slice %1 {offsets = [0, 0, 0], sizes = [10, 16, 8], strides = [1, 1, 1]} : vector<10x18x8xbf16> to vector<10x16x8xbf16>
    %3 = vector.extract_strided_slice %1 {offsets = [0, 1, 0], sizes = [10, 16, 8], strides = [1, 1, 1]} : vector<10x18x8xbf16> to vector<10x16x8xbf16>
    %4 = vector.extract_strided_slice %1 {offsets = [0, 2, 0], sizes = [10, 16, 8], strides = [1, 1, 1]} : vector<10x18x8xbf16> to vector<10x16x8xbf16>
    %5 = tpu.concatenate %2, %3, %4 in 2 : vector<10x16x8xbf16>, vector<10x16x8xbf16>, vector<10x16x8xbf16> -> vector<10x16x24xbf16>
    %6 = vector.extract_strided_slice %5 {offsets = [0, 0, 0], sizes = [8, 16, 24], strides = [1, 1, 1]} : vector<10x16x24xbf16> to vector<8x16x24xbf16>
    %7 = vector.extract_strided_slice %5 {offsets = [1, 0, 0], sizes = [8, 16, 24], strides = [1, 1, 1]} : vector<10x16x24xbf16> to vector<8x16x24xbf16>
    %8 = vector.extract_strided_slice %5 {offsets = [2, 0, 0], sizes = [8, 16, 24], strides = [1, 1, 1]} : vector<10x16x24xbf16> to vector<8x16x24xbf16>
    %9 = tpu.concatenate %6, %7, %8 in 2 : vector<8x16x24xbf16>, vector<8x16x24xbf16>, vector<8x16x24xbf16> -> vector<8x16x72xbf16>
    %10 = vector.shape_cast %9 : vector<8x16x72xbf16> to vector<128x72xbf16>
    %c0_3 = arith.constant 0 : index
    %c0_4 = arith.constant 0 : index
    %11 = vector.load %arg2[%c0_3, %c0_4] : memref<72x128xbf16, #tpu.memory_space<vmem>>, vector<72x128xbf16>
    %cst = arith.constant dense<0.000000e+00> : vector<128x128xf32>
    %12 = tpu.matmul %10, %11, %cst {dimension_numbers = #tpu.dot_dimension_numbers<[1], [0], [0], [1], [0, 0, 1, 1], [], []>} : vector<128x72xbf16>, vector<72x128xbf16>, vector<128x128xf32> -> vector<128x128xf32>
    %c0_5 = arith.constant 0 : index
    %c0_6 = arith.constant 0 : index
    %13 = vector.load %arg3[%c0_5, %c0_6] : memref<1x128xf32, #tpu.memory_space<vmem>>, vector<1x128xf32>
    %14 = vector.broadcast %13 : vector<1x128xf32> to vector<128x128xf32>
    %15 = arith.addf %12, %14 : vector<128x128xf32>
    %16 = arith.truncf %15 : vector<128x128xf32> to vector<128x128xbf16>
    %17 = vector.shape_cast %16 : vector<128x128xbf16> to vector<8x16x128xbf16>
    %c0_7 = arith.constant 0 : index
    %c0_8 = arith.constant 0 : index
    %c0_9 = arith.constant 0 : index
    %c0_10 = arith.constant 0 : index
    %18 = vector.load %arg4[%c0_7, %c0_8, %c0_9, %c0_10] : memref<1x8x16x128xbf16, #tpu.memory_space<vmem>>, vector<1x8x16x128xbf16>
    %19 = vector.shape_cast %18 : vector<1x8x16x128xbf16> to vector<8x16x128xbf16>
    %20 = vector.shape_cast %17 : vector<8x16x128xbf16> to vector<1x8x16x128xbf16>
    tpu.vector_store %arg4[%c0_7, %c0_8, %c0_9, %c0_10], %20 {strides = array<i32>} : memref<1x8x16x128xbf16, #tpu.memory_space<vmem>>, vector<1x8x16x128xbf16>,
    return
  }
  func.func @transform_0(%arg0: i32) -> (i32, i32, i32, i32) {
    %c0_i32 = arith.constant 0 : i32
    %c0_i32_0 = arith.constant 0 : i32
    %c0_i32_1 = arith.constant 0 : i32
    %c0_i32_2 = arith.constant 0 : i32
    return %arg0, %c0_i32, %c0_i32_0, %c0_i32_1 : i32, i32, i32, i32
  }
  func.func @transform_1(%arg0: i32) -> (i32, i32) {
    %c0_i32 = arith.constant 0 : i32
    %c0_i32_0 = arith.constant 0 : i32
    %c0_i32_1 = arith.constant 0 : i32
    return %c0_i32, %c0_i32_0 : i32, i32
  }
  func.func @transform_2(%arg0: i32) -> (i32, i32) {
    %c0_i32 = arith.constant 0 : i32
    %c0_i32_0 = arith.constant 0 : i32
    %c0_i32_1 = arith.constant 0 : i32
    return %c0_i32, %c0_i32_0 : i32, i32
  }
  func.func @transform_3(%arg0: i32) -> (i32, i32, i32, i32) {
    %c0_i32 = arith.constant 0 : i32
    %c0_i32_0 = arith.constant 0 : i32
    %c0_i32_1 = arith.constant 0 : i32
    %c0_i32_2 = arith.constant 0 : i32
    return %arg0, %c0_i32, %c0_i32_0, %c0_i32_1 : i32, i32, i32, i32
  }
}

</mosaic_0001>

<llo_original>
// kernel: tile.8
$region0: #{tile.8}
  #allocation0 [shape = 's32[1]{0}', space=sflag, size = 0x4, scoped, tag = 'scoped memory for tile.8']
  %s0 = inlined_call_operand.vmem [shape: f32[8], index: 0, kind: input, shape index: {}]
  %s1 = inlined_call_operand.vmem [shape: f32[16,8], index: 1, kind: output, shape index: {}]
  // Predicated region
  $region2: #{tile.8} parent=0 // pred_check
    _
  $region3: #{tile.8} parent=0 // pred_check_branch
    %3 = sbr.rel (0) target = $region5
  $region4: #{tile.8} parent=0 // pred_region
    _
  $region5: #{tile.8} parent=0 // pred_fallthru
    _
  %v4 = vld [vmem:[%s0] ss:$0 sm:$0xff]
  %5 = vst [vmem:[%s1] sm:$0xff] %v4
  %s6 = scalar_lea.vmem %s1, 8
  %7 = vst [vmem:[%s6] sm:$0xff] %v4

// kernel: tile.9
$region0: #{tile.9}
  %s0 = inlined_call_operand.vmem [shape: f32[16,8], index: 0, kind: input, shape index: {}]
  %s1 = inlined_call_operand.hbm [shape: f32[1,128], index: 1, kind: output, shape index: {}]
  $region1: #{tile.9} parent=0
    #allocation0 [shape = 'u8[512]{0}', space=vmem, size = 0x400, scoped, tag = 'operand span for operand 1']
    #allocation1 [shape = 's32[1]{0}', space=sflag, size = 0x4, scoped, tag = 'scoped memory for tile.9']
    #allocation2 [shape = 'u8[4096]{0}', space=vmem, size = 0x1000, scoped, tag = 'scoped mem for output reshape']
    %2 = vsyncpa [#allocation1], 0
    %v3 = vld [vmem:[%s0] sm:$0x1]
    %vm4 = vcmask 64512
    %5 = vst.msk [vmem:[#allocation2] sm:$0x1] %vm4, %v3
    %s6 = scalar_lea.vmem %s0, 15
    %v7 = vld [vmem:[%s6] sm:$0x1]
    %8 = vrot.lane.b32.xlu0 %v7, 120
    %v9 = vpop.permute.xlu0 %8
    %vm10 = vcmask 1048512
    %11 = vst.msk [vmem:[#allocation2] sm:$0x1] %vm10, %v9
    %s12 = scalar_lea.vmem %s0, 14
    %v13 = vld [vmem:[%s12] sm:$0x1]
    %14 = vrot.lane.b32.xlu0 %v13, 112
    %v15 = vpop.permute.xlu0 %14
    %vm16 = vcmask 982912
    %17 = vst.msk [vmem:[#allocation2] sm:$0x1] %vm16, %v15
    %s18 = scalar_lea.vmem %s0, 13
    %v19 = vld [vmem:[%s18] sm:$0x1]
    %20 = vrot.lane.b32.xlu0 %v19, 104
    %v21 = vpop.permute.xlu0 %20
    %vm22 = vcmask 917312
    %23 = vst.msk [vmem:[#allocation2] sm:$0x1] %vm22, %v21
    %s24 = scalar_lea.vmem %s0, 12
    %v25 = vld [vmem:[%s24] sm:$0x1]
    %26 = vrot.lane.b32.xlu0 %v25, 96
    %v27 = vpop.permute.xlu0 %26
    %vm28 = vcmask 851712
    %29 = vst.msk [vmem:[#allocation2] sm:$0x1] %vm28, %v27
    %s30 = scalar_lea.vmem %s0, 11
    %v31 = vld [vmem:[%s30] sm:$0x1]
    %32 = vrot.lane.b32.xlu0 %v31, 88
    %v33 = vpop.permute.xlu0 %32
    %vm34 = vcmask 786112
    %35 = vst.msk [vmem:[#allocation2] sm:$0x1] %vm34, %v33
    %s36 = scalar_lea.vmem %s0, 10
    %v37 = vld [vmem:[%s36] sm:$0x1]
    %38 = vrot.lane.b32.xlu0 %v37, 80
    %v39 = vpop.permute.xlu0 %38
    %vm40 = vcmask 720512
    %41 = vst.msk [vmem:[#allocation2] sm:$0x1] %vm40, %v39
    %s42 = scalar_lea.vmem %s0, 9
    %v43 = vld [vmem:[%s42] sm:$0x1]
    %44 = vrot.lane.b32.xlu0 %v43, 72
    %v45 = vpop.permute.xlu0 %44
    %vm46 = vcmask 654912
    %47 = vst.msk [vmem:[#allocation2] sm:$0x1] %vm46, %v45
    %s48 = scalar_lea.vmem %s0, 8
    %v49 = vld [vmem:[%s48] sm:$0x1]
    %50 = vrot.lane.b32.xlu0 %v49, 64
    %v51 = vpop.permute.xlu0 %50
    %vm52 = vcmask 589312
    %53 = vst.msk [vmem:[#allocation2] sm:$0x1] %vm52, %v51
    %s54 = scalar_lea.vmem %s0, 7
    %v55 = vld [vmem:[%s54] sm:$0x1]
    %56 = vrot.lane.b32.xlu0 %v55, 56
    %v57 = vpop.permute.xlu0 %56
    %vm58 = vcmask 523712
    %59 = vst.msk [vmem:[#allocation2] sm:$0x1] %vm58, %v57
    %s60 = scalar_lea.vmem %s0, 6
    %v61 = vld [vmem:[%s60] sm:$0x1]
    %62 = vrot.lane.b32.xlu0 %v61, 48
    %v63 = vpop.permute.xlu0 %62
    %vm64 = vcmask 458112
    %65 = vst.msk [vmem:[#allocation2] sm:$0x1] %vm64, %v63
    %s66 = scalar_lea.vmem %s0, 5
    %v67 = vld [vmem:[%s66] sm:$0x1]
    %68 = vrot.lane.b32.xlu0 %v67, 40
    %v69 = vpop.permute.xlu0 %68
    %vm70 = vcmask 392512
    %71 = vst.msk [vmem:[#allocation2] sm:$0x1] %vm70, %v69
    %s72 = scalar_lea.vmem %s0, 4
    %v73 = vld [vmem:[%s72] sm:$0x1]
    %74 = vrot.lane.b32.xlu0 %v73, 32
    %v75 = vpop.permute.xlu0 %74
    %vm76 = vcmask 326912
    %77 = vst.msk [vmem:[#allocation2] sm:$0x1] %vm76, %v75
    %s78 = scalar_lea.vmem %s0, 3
    %v79 = vld [vmem:[%s78] sm:$0x1]
    %80 = vrot.lane.b32.xlu0 %v79, 24
    %v81 = vpop.permute.xlu0 %80
    %vm82 = vcmask 261312
    %83 = vst.msk [vmem:[#allocation2] sm:$0x1] %vm82, %v81
    %s84 = scalar_lea.vmem %s0, 2
    %v85 = vld [vmem:[%s84] sm:$0x1]
    %86 = vrot.lane.b32.xlu0 %v85, 16
    %v87 = vpop.permute.xlu0 %86
    %vm88 = vcmask 195712
    %89 = vst.msk [vmem:[#allocation2] sm:$0x1] %vm88, %v87
    %s90 = scalar_lea.vmem %s0, 1
    %v91 = vld [vmem:[%s90] sm:$0x1]
    %92 = vrot.lane.b32.xlu0 %v91, 8
    %v93 = vpop.permute.xlu0 %92
    %vm94 = vcmask 130112
    %95 = vst.msk [vmem:[#allocation2] sm:$0x1] %vm94, %v93
    %s97 = sshllo.u32 0, 1
    %v99 = vld [vmem:[#allocation2] sm:%s97]
    %s100 = sshllo.u32 0, 1
    %101 = vst [vmem:[#allocation0] sm:%s100] %v99
    %s103 = ssub.s32 16, 16
    %104 = vsyncadd [#allocation1], %s103
    %s106 = sshll.u32 [#allocation0], 4
    %s107 = int_to_ptr.vmem [resolvable:$true] %s106
    %109 = dma.vmem_to_hbm [thread:$0]  %s107, 16, %s1, [#allocation1]
    %110 = dma.done [#allocation1], 16
    %111 = vsyncpa [#allocation1], 1

// kernel: _lambda_.1
$region0: #{_lambda_.1}
  #allocation0 [shape = 'u32[]', space=smem, size = 0x4, offset = 0x4, fixed_abs, tag = 'smem constant byte address 0x4 - core index']
  #allocation1 [shape = 'u32[144,128]{1,0:T(1,128)}', space=vmem, size = 0x12000, scoped, tag = 'internal scratch']
  %s0 = inlined_call_operand.hbm [shape: bf16[2,10,18,8], index: 0, kind: input, shape index: {}]
  %s1 = inlined_call_operand.hbm [shape: bf16[72,128], index: 1, kind: input, shape index: {}]
  %s2 = inlined_call_operand.hbm [shape: f32[1,128], index: 2, kind: input, shape index: {}]
  %s3 = inlined_call_operand.hbm [shape: bf16[2,8,16,128], index: 3, kind: output, shape index: {}]
  %s4 = sld [smem:[#allocation0]]
  $region57: #{_lambda_.1} parent=0
    _
  %s6 = ssub.s32 1, %s4
  %s7 = scalar_select 0, %s6, %s4
  $region1: #{_lambda_.1} parent=0
    #allocation2 [shape = 'u8[122880]{0}', space=vmem, size = 0x1e000, scoped, tag = 'input window, operand 0']
    #allocation3 [shape = 's32[2]{0}', space=sflag, size = 0x8, scoped, tag = 'scoped memory for _lambda_.1']
    #allocation4 [shape = 's32[2]{0}', space=sflag, size = 0x8, scoped, tag = 'scoped memory for _lambda_.1']
    #allocation5 [shape = 'u8[18432]{0}', space=vmem, size = 0x4800, scoped, tag = 'input window, operand 1, single buffered']
    #allocation6 [shape = 's32[1]{0}', space=sflag, size = 0x4, scoped, tag = 'scoped memory for _lambda_.1']
    #allocation7 [shape = 'u8[512]{0}', space=vmem, size = 0x400, scoped, tag = 'input window, operand 2, single buffered']
    #allocation8 [shape = 'u8[65536]{0}', space=vmem, size = 0x10000, scoped, tag = 'output window, operand 0']
    %8 = vsyncpa [#allocation3], 0
    %s9 = scalar_lea.sflag [#allocation3], 1
    %10 = vsyncpa %s9, 0
    %11 = vsyncpa [#allocation6], 0
    %12 = vsyncpa [#allocation4], 0
    %s13 = scalar_lea.sflag [#allocation4], 1
    %14 = vsyncpa %s13, 0
    loop: start=0, step=1, limit=4
    $region2: #{_lambda_.1} parent=1 // loop_pre_header
      _
    $region3: #{_lambda_.1} parent=1 // loop_header
      %s16 = sphi 0, %s20
      %p17 = scmp.ge.s32.totalorder %s16, 4
      %s26 = sphi 0, %s28
      %s29 = sphi 0, %s26
      %s30 = sphi 0, %s29
      %s46 = sphi 0, %s30
      %s50 = sphi 0, %s50
      %s52 = sphi 0, %s50
      %s53 = sphi 0, %s52
      %s67 = sphi 0, %s53
      %s71 = sphi 0, %s71
      %s73 = sphi 0, %s71
      %s74 = sphi 0, %s73
      %s88 = sphi 0, %s74
      %s94 = sphi 0, %s96
      %s97 = sphi 0, %s94
      %s98 = sphi 0, %s97
      %s114 = sphi 0, %s98
    $region4: #{_lambda_.1} parent=1 // loop_header_branch
      %19 = sbr.rel (%p17) target = $region8
    $region5: #{_lambda_.1} parent=1 // loop_body
      %s21 = ssub.s32 %s16, 1
      %s22 = ssub.s32 %s16, 2
      %s23 = sadd.s32 %s16, 1
      %s24 = ssub.s32 %s16, %s23
      %p25 = scmp.eq.s32.totalorder %s24, 0
      %s27 = sadd.s32 %s26, 1
      %s28 = scalar_select %p25, %s26, %s27
      %p31 = pneg %p25
      %p32 = scmp.eq.s32.totalorder %s16, 1
      %p33 = por %p31, %p32
      %p34 = scmp.ne.s32.totalorder %s26, %s29
      %p35 = scmp.eq.s32.totalorder %s16, 0
      %p36 = por %p34, %p35
      %p37 = scmp.ne.s32.totalorder %s26, %s29
      %p38 = scmp.eq.s32.totalorder %s21, 1
      %p39 = por %p37, %p38
      %p40 = scmp.ne.s32.totalorder %s29, %s30
      %p41 = scmp.eq.s32.totalorder %s21, 0
      %p42 = por %p40, %p41
      %p43 = scmp.ne.s32.totalorder %s29, %s30
      %p44 = scmp.eq.s32.totalorder %s22, 1
      %p45 = por %p43, %p44
      %p47 = scmp.ne.s32.totalorder %s30, %s46
      %p48 = scmp.eq.s32.totalorder %s22, 0
      %p49 = por %p47, %p48
      %s51 = sadd.s32 %s50, 1
      %p54 = scmp.eq.s32.totalorder %s16, 1
      %p55 = scmp.ne.s32.totalorder %s50, %s52
      %p56 = scmp.eq.s32.totalorder %s16, 0
      %p57 = por %p55, %p56
      %p58 = scmp.ne.s32.totalorder %s50, %s52
      %p59 = scmp.eq.s32.totalorder %s21, 1
      %p60 = por %p58, %p59
      %p61 = scmp.ne.s32.totalorder %s52, %s53
      %p62 = scmp.eq.s32.totalorder %s21, 0
      %p63 = por %p61, %p62
      %p64 = scmp.ne.s32.totalorder %s52, %s53
      %p65 = scmp.eq.s32.totalorder %s22, 1
      %p66 = por %p64, %p65
      %p68 = scmp.ne.s32.totalorder %s53, %s67
      %p69 = scmp.eq.s32.totalorder %s22, 0
      %p70 = por %p68, %p69
      %s72 = sadd.s32 %s71, 1
      %p75 = scmp.eq.s32.totalorder %s16, 1
      %p76 = scmp.ne.s32.totalorder %s71, %s73
      %p77 = scmp.eq.s32.totalorder %s16, 0
      %p78 = por %p76, %p77
      %p79 = scmp.ne.s32.totalorder %s71, %s73
      %p80 = scmp.eq.s32.totalorder %s21, 1
      %p81 = por %p79, %p80
      %p82 = scmp.ne.s32.totalorder %s73, %s74
      %p83 = scmp.eq.s32.totalorder %s21, 0
      %p84 = por %p82, %p83
      %p85 = scmp.ne.s32.totalorder %s73, %s74
      %p86 = scmp.eq.s32.totalorder %s22, 1
      %p87 = por %p85, %p86
      %p89 = scmp.ne.s32.totalorder %s74, %s88
      %p90 = scmp.eq.s32.totalorder %s22, 0
      %p91 = por %p89, %p90
      %s92 = ssub.s32 %s16, %s23
      %p93 = scmp.eq.s32.totalorder %s92, 0
      %s95 = sadd.s32 %s94, 1
      %s96 = scalar_select %p93, %s94, %s95
      %p99 = pneg %p93
      %p100 = scmp.eq.s32.totalorder %s16, 1
      %p101 = por %p99, %p100
      %p102 = scmp.ne.s32.totalorder %s94, %s97
      %p103 = scmp.eq.s32.totalorder %s16, 0
      %p104 = por %p102, %p103
      %p105 = scmp.ne.s32.totalorder %s94, %s97
      %p106 = scmp.eq.s32.totalorder %s21, 1
      %p107 = por %p105, %p106
      %p108 = scmp.ne.s32.totalorder %s97, %s98
      %p109 = scmp.eq.s32.totalorder %s21, 0
      %p110 = por %p108, %p109
      %p111 = scmp.ne.s32.totalorder %s97, %s98
      %p112 = scmp.eq.s32.totalorder %s22, 1
      %p113 = por %p111, %p112
      %p115 = scmp.ne.s32.totalorder %s98, %s114
      %p116 = scmp.eq.s32.totalorder %s22, 0
      %p117 = por %p115, %p116
      %p118 = scmp.le.s32.totalorder 1, %s16
      %p119 = scmp.lt.s32.totalorder %s16, 3
      %p120 = pnand %p118, %p119
      %p121 = pneg %p120
      // Predicated region
      $region9: #{_lambda_.1} parent=5 // pred_check
        _
      $region10: #{_lambda_.1} parent=5 // pred_check_branch
        %123 = sbr.rel (%p120) target = $region12
      $region11: #{_lambda_.1} parent=5 // pred_region
        %s124 = ssub.s32 %s16, 1
        // Predicated region
        $region13: #{_lambda_.1} parent=11 // pred_check
          %p125 = pneg %p63
        $region14: #{_lambda_.1} parent=11 // pred_check_branch
          %127 = sbr.rel (%p125) target = $region16
        $region15: #{_lambda_.1} parent=11 // pred_region
          %s129 = ssub.s32 576, 576
          %130 = vsyncadd [#allocation6], %s129
          %s131 = sshll.u32 [#allocation5], 4
          %s132 = int_to_ptr.vmem [resolvable:$true] %s131
          %137 = dma.hbm_to_vmem [thread:$0]  %s1, 576, %s132, [#allocation6], 64, 64, 4
        $region16: #{_lambda_.1} parent=11 // pred_fallthru
          _
        // Predicated region
        $region17: #{_lambda_.1} parent=11 // pred_check
          %p138 = pneg %p84
        $region18: #{_lambda_.1} parent=11 // pred_check_branch
          %140 = sbr.rel (%p138) target = $region20
        $region19: #{_lambda_.1} parent=11 // pred_region
          %s142 = ssub.s32 16, 16
          %143 = vsyncadd [#allocation6], %s142
          %s145 = sshll.u32 [#allocation7], 4
          %s146 = int_to_ptr.vmem [resolvable:$true] %s145
          %148 = dma.hbm_to_vmem [thread:$0]  %s2, 16, %s146, [#allocation6]
        $region20: #{_lambda_.1} parent=11 // pred_fallthru
          _
      $region12: #{_lambda_.1} parent=5 // pred_fallthru
        _
      %p149 = scmp.lt.s32.totalorder %s16, 2
      // Predicated region
      $region21: #{_lambda_.1} parent=5 // pred_check
        %p150 = pneg %p149
      $region22: #{_lambda_.1} parent=5 // pred_check_branch
        %152 = sbr.rel (%p150) target = $region24
      $region23: #{_lambda_.1} parent=5 // pred_region
        // Predicated region
        $region25: #{_lambda_.1} parent=23 // pred_check
          %p153 = pneg %p36
        $region26: #{_lambda_.1} parent=23 // pred_check_branch
          %155 = sbr.rel (%p153) target = $region28
        $region27: #{_lambda_.1} parent=23 // pred_region
          %s156 = sand.u32 %s26, 1
          %s157 = scalar_lea.sflag [#allocation3], %s156
          %s158 = sand.u32 %s26, 1
          %s159 = smul.addr %s158, 120
          %s160 = scalar_lea.vmem [#allocation2], %s159
          %s162 = ssub.s32 1920, 1920
          %163 = vsyncadd %s157, %s162
          %s164 = smul.addr %s16, 30
          %s165 = smul.addr %s164, 64
          %s166 = scalar_lea.hbm %s0, %s165
          %s167 = sshll.u32 %s160, 4
          %s168 = int_to_ptr.vmem [resolvable:$true] %s167
          %173 = dma.hbm_to_vmem [thread:$0]  %s166, 1920, %s168, %s157, 64, 64, 4
        $region28: #{_lambda_.1} parent=23 // pred_fallthru
          _
      $region24: #{_lambda_.1} parent=5 // pred_fallthru
        _
      %p174 = scmp.le.s32.totalorder 1, %s16
      %p175 = scmp.lt.s32.totalorder %s16, 3
      %p176 = pnand %p174, %p175
      %p177 = pneg %p176
      // Predicated region
      $region29: #{_lambda_.1} parent=5 // pred_check
        _
      $region30: #{_lambda_.1} parent=5 // pred_check_branch
        %179 = sbr.rel (%p176) target = $region32
      $region31: #{_lambda_.1} parent=5 // pred_region
        %s180 = ssub.s32 %s16, 1
        %s181 = sand.u32 %s29, 1
        %s182 = scalar_lea.sflag [#allocation3], %s181
        %s183 = sand.u32 %s29, 1
        %s184 = smul.addr %s183, 120
        %s185 = scalar_lea.vmem [#allocation2], %s184
        // Predicated region
        $region33: #{_lambda_.1} parent=31 // pred_check
          %p186 = pneg %p42
        $region34: #{_lambda_.1} parent=31 // pred_check_branch
          %188 = sbr.rel (%p186) target = $region36
        $region35: #{_lambda_.1} parent=31 // pred_region
          %189 = dma.done %s182, 1920
        $region36: #{_lambda_.1} parent=31 // pred_fallthru
          _
        // Predicated region
        $region37: #{_lambda_.1} parent=31 // pred_check
          %p190 = pneg %p63
        $region38: #{_lambda_.1} parent=31 // pred_check_branch
          %192 = sbr.rel (%p190) target = $region40
        $region39: #{_lambda_.1} parent=31 // pred_region
          %193 = dma.done [#allocation6], 576
        $region40: #{_lambda_.1} parent=31 // pred_fallthru
          _
        // Predicated region
        $region41: #{_lambda_.1} parent=31 // pred_check
          %p194 = pneg %p84
        $region42: #{_lambda_.1} parent=31 // pred_check_branch
          %196 = sbr.rel (%p194) target = $region44
        $region43: #{_lambda_.1} parent=31 // pred_region
          %197 = dma.done [#allocation6], 16
        $region44: #{_lambda_.1} parent=31 // pred_fallthru
          _
        %s198 = sand.u32 %s29, 1
        %s199 = scalar_lea.sflag [#allocation3], %s198
        %s200 = sand.u32 %s29, 1
        %s201 = smul.addr %s200, 120
        %s202 = scalar_lea.vmem [#allocation2], %s201
        %p203 = pneg %p42
        %p204 = pneg %p39
        %p205 = pneg %p63
        %p206 = pneg %p60
        %p207 = pneg %p84
        %p208 = pneg %p81
        %p209 = pneg %p110
        %p210 = pneg %p107
        %s211 = sand.u32 %s97, 1
        %s212 = scalar_lea.sflag [#allocation4], %s211
        %s213 = sand.u32 %s97, 1
        %s214 = smul.addr %s213, 64
        %s215 = scalar_lea.vmem [#allocation8], %s214
        %v217 = vld [vmem:[%s185] sm:$0xf]
        %v218 = vld [vmem:[%s185 + $0x4] sm:$0xf]
        %v219 = vld [vmem:[%s185 + $0x8] sm:$0x1]
        %v220 = vld [vmem:[%s185 + $0xc] sm:$0xf]
        %v221 = vld [vmem:[%s185 + $0x10] sm:$0xf]
        %v222 = vld [vmem:[%s185 + $0x14] sm:$0x1]
        %v223 = vld [vmem:[%s185 + $0x18] sm:$0xf]
        %v224 = vld [vmem:[%s185 + $0x1c] sm:$0xf]
        %v225 = vld [vmem:[%s185 + $0x20] sm:$0x1]
        %v226 = vld [vmem:[%s185 + $0x24] sm:$0xf]
        %v227 = vld [vmem:[%s185 + $0x28] sm:$0xf]
        %v228 = vld [vmem:[%s185 + $0x2c] sm:$0x1]
        %v229 = vld [vmem:[%s185 + $0x30] sm:$0xf]
        %v230 = vld [vmem:[%s185 + $0x34] sm:$0xf]
        %v231 = vld [vmem:[%s185 + $0x38] sm:$0x1]
        %v232 = vld [vmem:[%s185 + $0x3c] sm:$0xf]
        %v233 = vld [vmem:[%s185 + $0x40] sm:$0xf]
        %v234 = vld [vmem:[%s185 + $0x44] sm:$0x1]
        %v235 = vld [vmem:[%s185 + $0x48] sm:$0xf]
        %v236 = vld [vmem:[%s185 + $0x4c] sm:$0xf]
        %v237 = vld [vmem:[%s185 + $0x50] sm:$0x1]
        %v238 = vld [vmem:[%s185 + $0x54] sm:$0xf]
        %v239 = vld [vmem:[%s185 + $0x58] sm:$0xf]
        %v240 = vld [vmem:[%s185 + $0x5c] sm:$0x1]
        %v241 = vld [vmem:[%s185 + $0x60] sm:$0xf]
        %v242 = vld [vmem:[%s185 + $0x64] sm:$0xf]
        %v243 = vld [vmem:[%s185 + $0x68] sm:$0x1]
        %v244 = vld [vmem:[%s185 + $0x6c] sm:$0xf]
        %v245 = vld [vmem:[%s185 + $0x70] sm:$0xf]
        %v246 = vld [vmem:[%s185 + $0x74] sm:$0x1]
        %v267 = vunpack.c.l.b16 %v217
        %v268 = vunpack.c.l.b16 %v218
        %v269 = vunpack.c.l.b16 %v220
        %v270 = vunpack.c.l.b16 %v221
        %v271 = vunpack.c.l.b16 %v223
        %v272 = vunpack.c.l.b16 %v224
        %v273 = vunpack.c.l.b16 %v226
        %v274 = vunpack.c.l.b16 %v227
        %v275 = vunpack.c.l.b16 %v229
        %v276 = vunpack.c.l.b16 %v230
        %v277 = vunpack.c.l.b16 %v232
        %v278 = vunpack.c.l.b16 %v233
        %v279 = vunpack.c.l.b16 %v235
        %v280 = vunpack.c.l.b16 %v236
        %v281 = vunpack.c.l.b16 %v238
        %v282 = vunpack.c.l.b16 %v239
        %v283 = vunpack.c.l.b16 %v241
        %v284 = vunpack.c.l.b16 %v242
        %v285 = vunpack.c.l.b16 %v244
        %v286 = vunpack.c.l.b16 %v245
        %v287 = vpack.c.b16 %v268, %v267
        %v288 = vpack.c.b16 %v270, %v269
        %v289 = vpack.c.b16 %v272, %v271
        %v290 = vpack.c.b16 %v274, %v273
        %v291 = vpack.c.b16 %v276, %v275
        %v292 = vpack.c.b16 %v278, %v277
        %v293 = vpack.c.b16 %v280, %v279
        %v294 = vpack.c.b16 %v282, %v281
        %v295 = vpack.c.b16 %v284, %v283
        %v296 = vpack.c.b16 %v286, %v285
        %v307 = vunpack.c.l.b16 %v219
        %v308 = vunpack.c.l.b16 %v222
        %v309 = vunpack.c.l.b16 %v225
        %v310 = vunpack.c.l.b16 %v228
        %v311 = vunpack.c.l.b16 %v231
        %v312 = vunpack.c.l.b16 %v234
        %v313 = vunpack.c.l.b16 %v237
        %v314 = vunpack.c.l.b16 %v240
        %v315 = vunpack.c.l.b16 %v243
        %v316 = vunpack.c.l.b16 %v246
        %v317 = vpack.c.b16 %v307, %v307
        %v318 = vpack.c.b16 %v308, %v308
        %v319 = vpack.c.b16 %v309, %v309
        %v320 = vpack.c.b16 %v310, %v310
        %v321 = vpack.c.b16 %v311, %v311
        %v322 = vpack.c.b16 %v312, %v312
        %v323 = vpack.c.b16 %v313, %v313
        %v324 = vpack.c.b16 %v314, %v314
        %v325 = vpack.c.b16 %v315, %v315
        %v326 = vpack.c.b16 %v316, %v316
        %vm327 = vsmask.f32 7424
        %v329 = vshrl.u32 %v287, 16
        %v331 = vshll.u32 %v287, 16
        %v333 = vrot.slane %v331, 1
        %v334 = vor.u32 %v329, %v333
        %v336 = vshll.u32 %v317, 16
        %v338 = vrot.slane %v336, 1
        %v339 = vsel %vm327, %v334, %v338
        %v341 = vshrl.u32 %v288, 16
        %v343 = vshll.u32 %v288, 16
        %v345 = vrot.slane %v343, 1
        %v346 = vor.u32 %v341, %v345
        %v348 = vshll.u32 %v318, 16
        %v350 = vrot.slane %v348, 1
        %v351 = vsel %vm327, %v346, %v350
        %v353 = vshrl.u32 %v289, 16
        %v355 = vshll.u32 %v289, 16
        %v357 = vrot.slane %v355, 1
        %v358 = vor.u32 %v353, %v357
        %v360 = vshll.u32 %v319, 16
        %v362 = vrot.slane %v360, 1
        %v363 = vsel %vm327, %v358, %v362
        %v365 = vshrl.u32 %v290, 16
        %v367 = vshll.u32 %v290, 16
        %v369 = vrot.slane %v367, 1
        %v370 = vor.u32 %v365, %v369
        %v372 = vshll.u32 %v320, 16
        %v374 = vrot.slane %v372, 1
        %v375 = vsel %vm327, %v370, %v374
        %v377 = vshrl.u32 %v291, 16
        %v379 = vshll.u32 %v291, 16
        %v381 = vrot.slane %v379, 1
        %v382 = vor.u32 %v377, %v381
        %v384 = vshll.u32 %v321, 16
        %v386 = vrot.slane %v384, 1
        %v387 = vsel %vm327, %v382, %v386
        %v389 = vshrl.u32 %v292, 16
        %v391 = vshll.u32 %v292, 16
        %v393 = vrot.slane %v391, 1
        %v394 = vor.u32 %v389, %v393
        %v396 = vshll.u32 %v322, 16
        %v398 = vrot.slane %v396, 1
        %v399 = vsel %vm327, %v394, %v398
        %v401 = vshrl.u32 %v293, 16
        %v403 = vshll.u32 %v293, 16
        %v405 = vrot.slane %v403, 1
        %v406 = vor.u32 %v401, %v405
        %v408 = vshll.u32 %v323, 16
        %v410 = vrot.slane %v408, 1
        %v411 = vsel %vm327, %v406, %v410
        %v413 = vshrl.u32 %v294, 16
        %v415 = vshll.u32 %v294, 16
        %v417 = vrot.slane %v415, 1
        %v418 = vor.u32 %v413, %v417
        %v420 = vshll.u32 %v324, 16
        %v422 = vrot.slane %v420, 1
        %v423 = vsel %vm327, %v418, %v422
        %v425 = vshrl.u32 %v295, 16
        %v427 = vshll.u32 %v295, 16
        %v429 = vrot.slane %v427, 1
        %v430 = vor.u32 %v425, %v429
        %v432 = vshll.u32 %v325, 16
        %v434 = vrot.slane %v432, 1
        %v435 = vsel %vm327, %v430, %v434
        %v437 = vshrl.u32 %v296, 16
        %v439 = vshll.u32 %v296, 16
        %v441 = vrot.slane %v439, 1
        %v442 = vor.u32 %v437, %v441
        %v444 = vshll.u32 %v326, 16
        %v446 = vrot.slane %v444, 1
        %v447 = vsel %vm327, %v442, %v446
        %448 = vrot.lane.b32.xlu0 %v339, 8
        %v449 = vpop.permute.xlu0 %448
        %450 = vrot.lane.b32.xlu0 %v351, 8
        %v451 = vpop.permute.xlu0 %450
        %452 = vrot.lane.b32.xlu0 %v363, 8
        %v453 = vpop.permute.xlu0 %452
        %454 = vrot.lane.b32.xlu0 %v375, 8
        %v455 = vpop.permute.xlu0 %454
        %456 = vrot.lane.b32.xlu0 %v387, 8
        %v457 = vpop.permute.xlu0 %456
        %458 = vrot.lane.b32.xlu0 %v399, 8
        %v459 = vpop.permute.xlu0 %458
        %460 = vrot.lane.b32.xlu0 %v411, 8
        %v461 = vpop.permute.xlu0 %460
        %462 = vrot.lane.b32.xlu0 %v423, 8
        %v463 = vpop.permute.xlu0 %462
        %464 = vrot.lane.b32.xlu0 %v435, 8
        %v465 = vpop.permute.xlu0 %464
        %466 = vrot.lane.b32.xlu0 %v447, 8
        %v467 = vpop.permute.xlu0 %466
        %vm468 = vcmask 1046528
        %v469 = vrot.slane %v287, 1
        %v470 = vrot.slane %v317, 1
        %v471 = vsel %vm468, %v469, %v470
        %v472 = vrot.slane %v288, 1
        %v473 = vrot.slane %v318, 1
        %v474 = vsel %vm468, %v472, %v473
        %v475 = vrot.slane %v289, 1
        %v476 = vrot.slane %v319, 1
        %v477 = vsel %vm468, %v475, %v476
        %v478 = vrot.slane %v290, 1
        %v479 = vrot.slane %v320, 1
        %v480 = vsel %vm468, %v478, %v479
        %v481 = vrot.slane %v291, 1
        %v482 = vrot.slane %v321, 1
        %v483 = vsel %vm468, %v481, %v482
        %v484 = vrot.slane %v292, 1
        %v485 = vrot.slane %v322, 1
        %v486 = vsel %vm468, %v484, %v485
        %v487 = vrot.slane %v293, 1
        %v488 = vrot.slane %v323, 1
        %v489 = vsel %vm468, %v487, %v488
        %v490 = vrot.slane %v294, 1
        %v491 = vrot.slane %v324, 1
        %v492 = vsel %vm468, %v490, %v491
        %v493 = vrot.slane %v295, 1
        %v494 = vrot.slane %v325, 1
        %v495 = vsel %vm468, %v493, %v494
        %v496 = vrot.slane %v296, 1
        %v497 = vrot.slane %v326, 1
        %v498 = vsel %vm468, %v496, %v497
        %499 = vrot.lane.b32.xlu0 %v471, 16
        %v500 = vpop.permute.xlu0 %499
        %501 = vrot.lane.b32.xlu0 %v474, 16
        %v502 = vpop.permute.xlu0 %501
        %503 = vrot.lane.b32.xlu0 %v477, 16
        %v504 = vpop.permute.xlu0 %503
        %505 = vrot.lane.b32.xlu0 %v480, 16
        %v506 = vpop.permute.xlu0 %505
        %507 = vrot.lane.b32.xlu0 %v483, 16
        %v508 = vpop.permute.xlu0 %507
        %509 = vrot.lane.b32.xlu0 %v486, 16
        %v510 = vpop.permute.xlu0 %509
        %511 = vrot.lane.b32.xlu0 %v489, 16
        %v512 = vpop.permute.xlu0 %511
        %513 = vrot.lane.b32.xlu0 %v492, 16
        %v514 = vpop.permute.xlu0 %513
        %515 = vrot.lane.b32.xlu0 %v495, 16
        %v516 = vpop.permute.xlu0 %515
        %517 = vrot.lane.b32.xlu0 %v498, 16
        %v518 = vpop.permute.xlu0 %517
        %vm519 = vcmask 64512
        %v521 = vsel %vm519, %v287, %v449
        %v523 = vsel %vm519, %v288, %v451
        %v525 = vsel %vm519, %v289, %v453
        %v527 = vsel %vm519, %v290, %v455
        %v529 = vsel %vm519, %v291, %v457
        %v531 = vsel %vm519, %v292, %v459
        %v533 = vsel %vm519, %v293, %v461
        %v535 = vsel %vm519, %v294, %v463
        %v537 = vsel %vm519, %v295, %v465
        %v539 = vsel %vm519, %v296, %v467
        %vm540 = vcmask 130048
        %v542 = vsel %vm540, %v521, %v500
        %v544 = vsel %vm540, %v523, %v502
        %v546 = vsel %vm540, %v525, %v504
        %v548 = vsel %vm540, %v527, %v506
        %v550 = vsel %vm540, %v529, %v508
        %v552 = vsel %vm540, %v531, %v510
        %v554 = vsel %vm540, %v533, %v512
        %v556 = vsel %vm540, %v535, %v514
        %v558 = vsel %vm540, %v537, %v516
        %v560 = vsel %vm540, %v539, %v518
        %569 = vrot.lane.b32.xlu0 %v544, 24
        %v570 = vpop.permute.xlu0 %569
        %571 = vrot.lane.b32.xlu0 %v546, 24
        %v572 = vpop.permute.xlu0 %571
        %573 = vrot.lane.b32.xlu0 %v548, 24
        %v574 = vpop.permute.xlu0 %573
        %575 = vrot.lane.b32.xlu0 %v550, 24
        %v576 = vpop.permute.xlu0 %575
        %577 = vrot.lane.b32.xlu0 %v552, 24
        %v578 = vpop.permute.xlu0 %577
        %579 = vrot.lane.b32.xlu0 %v554, 24
        %v580 = vpop.permute.xlu0 %579
        %581 = vrot.lane.b32.xlu0 %v556, 24
        %v582 = vpop.permute.xlu0 %581
        %583 = vrot.lane.b32.xlu0 %v558, 24
        %v584 = vpop.permute.xlu0 %583
        %586 = vrot.lane.b32.xlu0 %v546, 48
        %v587 = vpop.permute.xlu0 %586
        %588 = vrot.lane.b32.xlu0 %v548, 48
        %v589 = vpop.permute.xlu0 %588
        %590 = vrot.lane.b32.xlu0 %v550, 48
        %v591 = vpop.permute.xlu0 %590
        %592 = vrot.lane.b32.xlu0 %v552, 48
        %v593 = vpop.permute.xlu0 %592
        %594 = vrot.lane.b32.xlu0 %v554, 48
        %v595 = vpop.permute.xlu0 %594
        %596 = vrot.lane.b32.xlu0 %v556, 48
        %v597 = vpop.permute.xlu0 %596
        %598 = vrot.lane.b32.xlu0 %v558, 48
        %v599 = vpop.permute.xlu0 %598
        %600 = vrot.lane.b32.xlu0 %v560, 48
        %v601 = vpop.permute.xlu0 %600
        %vm602 = vcmask 195584
        %v604 = vsel %vm602, %v542, %v570
        %v606 = vsel %vm602, %v544, %v572
        %v608 = vsel %vm602, %v546, %v574
        %v610 = vsel %vm602, %v548, %v576
        %v612 = vsel %vm602, %v550, %v578
        %v614 = vsel %vm602, %v552, %v580
        %v616 = vsel %vm602, %v554, %v582
        %v618 = vsel %vm602, %v556, %v584
        %vm619 = vcmask 392192
        %v621 = vsel %vm619, %v604, %v587
        %v623 = vsel %vm619, %v606, %v589
        %v625 = vsel %vm619, %v608, %v591
        %v627 = vsel %vm619, %v610, %v593
        %v629 = vsel %vm619, %v612, %v595
        %v631 = vsel %vm619, %v614, %v597
        %v633 = vsel %vm619, %v616, %v599
        %v635 = vsel %vm619, %v618, %v601
        %v636 = vld [vmem:[#allocation5] sm:$0xf]
        %v637 = vld [vmem:[#allocation5 + $0x4] sm:$0xf]
        %v638 = vld [vmem:[#allocation5 + $0x8] sm:$0xf]
        %v639 = vld [vmem:[#allocation5 + $0xc] sm:$0xf]
        %v640 = vld [vmem:[#allocation5 + $0x10] sm:$0xf]
        %v641 = vld [vmem:[#allocation5 + $0x14] sm:$0xf]
        %v642 = vld [vmem:[#allocation5 + $0x18] sm:$0xf]
        %v643 = vld [vmem:[#allocation5 + $0x1c] sm:$0xf]
        %v644 = vld [vmem:[#allocation5 + $0x20] sm:$0xf]
        %v645 = vld [vmem:[#allocation7] sm:$0x1]
        %v647 = vlaneseq
        %v648 = vshrl.u32 %v647, 7
        %v649 = vsub.s32 0, %v648
        %v650 = vrot.slane %v645, %v649
        %v661 = vunpack.c.l.b16 %v636
        %v662 = vunpack.c.l.b16 %v637
        %v663 = vunpack.c.l.b16 %v638
        %v664 = vunpack.c.l.b16 %v639
        %v665 = vunpack.c.l.b16 %v640
        %v666 = vunpack.c.l.b16 %v641
        %v667 = vunpack.c.l.b16 %v642
        %v668 = vunpack.c.l.b16 %v643
        %v669 = vunpack.c.l.b16 %v644
        %v670 = vpack.c.b16 %v662, %v661
        %v671 = vpack.c.b16 %v664, %v663
        %v672 = vpack.c.b16 %v666, %v665
        %v673 = vpack.c.b16 %v668, %v667
        %v674 = vpack.c.b16 %v669, %v669
        %vm679 = vcmask 588800
        %v680 = vsel %vm679, %v621, 0
        %v682 = vsel %vm679, %v623, 0
        %v684 = vsel %vm679, %v625, 0
        %v686 = vsel %vm679, %v627, 0
        %v688 = vsel %vm679, %v629, 0
        %v690 = vsel %vm679, %v631, 0
        %v692 = vsel %vm679, %v633, 0
        %v694 = vsel %vm679, %v635, 0
        %vm696 = vcmask 1043456
        %v698 = vsel %vm696, %v674, 0
        %700 = vmatprep.subr.bf16.mxu0 0
        %701 = vmatpush1.bf16.msra.mxu0 %v670
        %702 = vmatprep.subr.bf16.mxu0 0
        %703 = vmatpush1.bf16.msra.mxu0 %v671
        %704 = vmatprep.subr.bf16.mxu0 0
        %705 = vmatpush1.bf16.msra.mxu0 %v672
        %706 = vmatprep.subr.bf16.mxu0 0
        %707 = vmatpush1.bf16.msra.mxu0 %v673
        %708 = vmatprep.subr.bf16.mxu0 0
        %709 = vmatpush1.bf16.msra.mxu0 %v698
        %710 = vmatprep.subr.bf16.mxu0 0
        %711 = vmatpush1.bf16.msra.mxu0 0
        %712 = vmatprep.subr.bf16.mxu0 0
        %713 = vmatpush1.bf16.msra.mxu0 0
        %714 = vmatprep.subr.bf16.mxu0 0
        %715 = vmatpush1.bf16.msra.mxu0 0
        %716 = vmatprep.subr.bf16.mxu0 0
        %717 = vmatpush1.bf16.msra.mxu0 0
        %718 = vmatprep.subr.bf16.mxu0 0
        %719 = vmatpush1.bf16.msra.mxu0 0
        %720 = vmatprep.subr.bf16.mxu0 0
        %721 = vmatpush1.bf16.msra.mxu0 0
        %722 = vmatprep.subr.bf16.mxu0 0
        %723 = vmatpush1.bf16.msra.mxu0 0
        %724 = vmatprep.subr.bf16.mxu0 0
        %725 = vmatpush1.bf16.msra.mxu0 0
        %726 = vmatprep.subr.bf16.mxu0 0
        %727 = vmatpush1.bf16.msra.mxu0 0
        %728 = vmatprep.subr.bf16.mxu0 0
        %729 = vmatpush1.bf16.msra.mxu0 0
        %730 = vmatprep.subr.bf16.mxu0 0
        %731 = vmatpush1.bf16.msra.mxu0 0
        %732 = vmatprep.mubr.bf16.mxu0 0
        %733 = vmatmul.mubr.bf16.gmra.mrb[0].mxu0 %v680
        %v734 = vpop.f32.mrb[0].mxu0
        %v735 = vadd.f32 %v650, %v734
        %v736 = vpop.f32.mrb[0].mxu0
        %v737 = vpop.f32.mrb[0].mxu0
        %v738 = vadd.f32 %v650, %v737
        %v739 = vpop.f32.mrb[0].mxu0
        %740 = vmatprep.mubr.bf16.mxu0 0
        %741 = vmatmul.mubr.bf16.gmra.mrb[0].mxu0 %v682
        %v742 = vpop.f32.mrb[0].mxu0
        %v743 = vadd.f32 %v650, %v742
        %v744 = vpop.f32.mrb[0].mxu0
        %v745 = vpop.f32.mrb[0].mxu0
        %v746 = vadd.f32 %v650, %v745
        %v747 = vpop.f32.mrb[0].mxu0
        %748 = vmatprep.mubr.bf16.mxu0 0
        %749 = vmatmul.mubr.bf16.gmra.mrb[0].mxu0 %v684
        %v750 = vpop.f32.mrb[0].mxu0
        %v751 = vadd.f32 %v650, %v750
        %v752 = vpop.f32.mrb[0].mxu0
        %v753 = vpop.f32.mrb[0].mxu0
        %v754 = vadd.f32 %v650, %v753
        %v755 = vpop.f32.mrb[0].mxu0
        %756 = vmatprep.mubr.bf16.mxu0 0
        %757 = vmatmul.mubr.bf16.gmra.mrb[0].mxu0 %v686
        %v758 = vpop.f32.mrb[0].mxu0
        %v759 = vadd.f32 %v650, %v758
        %v760 = vpop.f32.mrb[0].mxu0
        %v761 = vpop.f32.mrb[0].mxu0
        %v762 = vadd.f32 %v650, %v761
        %v763 = vpop.f32.mrb[0].mxu0
        %764 = vmatprep.mubr.bf16.mxu0 0
        %765 = vmatmul.mubr.bf16.gmra.mrb[0].mxu0 %v688
        %v766 = vpop.f32.mrb[0].mxu0
        %v767 = vadd.f32 %v650, %v766
        %v768 = vpop.f32.mrb[0].mxu0
        %v769 = vpop.f32.mrb[0].mxu0
        %v770 = vadd.f32 %v650, %v769
        %v771 = vpop.f32.mrb[0].mxu0
        %772 = vmatprep.mubr.bf16.mxu0 0
        %773 = vmatmul.mubr.bf16.gmra.mrb[0].mxu0 %v690
        %v774 = vpop.f32.mrb[0].mxu0
        %v775 = vadd.f32 %v650, %v774
        %v776 = vpop.f32.mrb[0].mxu0
        %v777 = vpop.f32.mrb[0].mxu0
        %v778 = vadd.f32 %v650, %v777
        %v779 = vpop.f32.mrb[0].mxu0
        %780 = vmatprep.mubr.bf16.mxu0 0
        %781 = vmatmul.mubr.bf16.gmra.mrb[0].mxu0 %v692
        %v782 = vpop.f32.mrb[0].mxu0
        %v783 = vadd.f32 %v650, %v782
        %v784 = vpop.f32.mrb[0].mxu0
        %v785 = vpop.f32.mrb[0].mxu0
        %v786 = vadd.f32 %v650, %v785
        %v787 = vpop.f32.mrb[0].mxu0
        %788 = vmatprep.mubr.bf16.mxu0 0
        %789 = vmatmul.mubr.bf16.gmra.mrb[0].mxu0 %v694
        %v790 = vpop.f32.mrb[0].mxu0
        %v791 = vadd.f32 %v650, %v790
        %v792 = vpop.f32.mrb[0].mxu0
        %v793 = vpop.f32.mrb[0].mxu0
        %v794 = vadd.f32 %v650, %v793
        %v795 = vpop.f32.mrb[0].mxu0
        %796 = vdwg.mxu0
        %v797 = vpack.c.bf16 %v738, %v735
        %v798 = vpack.c.bf16 %v746, %v743
        %v799 = vpack.c.bf16 %v754, %v751
        %v800 = vpack.c.bf16 %v762, %v759
        %v801 = vpack.c.bf16 %v770, %v767
        %v802 = vpack.c.bf16 %v778, %v775
        %v803 = vpack.c.bf16 %v786, %v783
        %v804 = vpack.c.bf16 %v794, %v791
        %v813 = vunpack.c.l.b16 %v797
        %v814 = vunpack.c.h.b16 %v797
        %v815 = vunpack.c.l.b16 %v798
        %v816 = vunpack.c.h.b16 %v798
        %v817 = vunpack.c.l.b16 %v799
        %v818 = vunpack.c.h.b16 %v799
        %v819 = vunpack.c.l.b16 %v800
        %v820 = vunpack.c.h.b16 %v800
        %v821 = vunpack.c.l.b16 %v801
        %v822 = vunpack.c.h.b16 %v801
        %v823 = vunpack.c.l.b16 %v802
        %v824 = vunpack.c.h.b16 %v802
        %v825 = vunpack.c.l.b16 %v803
        %v826 = vunpack.c.h.b16 %v803
        %v827 = vunpack.c.l.b16 %v804
        %v828 = vunpack.c.h.b16 %v804
        %v829 = vpack.c.b16 %v813, %v813
        %v830 = vpack.c.b16 %v814, %v814
        %v831 = vpack.c.b16 %v815, %v815
        %v832 = vpack.c.b16 %v816, %v816
        %v833 = vpack.c.b16 %v817, %v817
        %v834 = vpack.c.b16 %v818, %v818
        %v835 = vpack.c.b16 %v819, %v819
        %v836 = vpack.c.b16 %v820, %v820
        %v837 = vpack.c.b16 %v821, %v821
        %v838 = vpack.c.b16 %v822, %v822
        %v839 = vpack.c.b16 %v823, %v823
        %v840 = vpack.c.b16 %v824, %v824
        %v841 = vpack.c.b16 %v825, %v825
        %v842 = vpack.c.b16 %v826, %v826
        %v843 = vpack.c.b16 %v827, %v827
        %v844 = vpack.c.b16 %v828, %v828
        %861 = vst [vmem:[%s215] sm:$0xf] %v829
        %862 = vst [vmem:[%s215 + $0x4] sm:$0xf] %v830
        %863 = vst [vmem:[%s215 + $0x8] sm:$0xf] %v831
        %864 = vst [vmem:[%s215 + $0xc] sm:$0xf] %v832
        %865 = vst [vmem:[%s215 + $0x10] sm:$0xf] %v833
        %866 = vst [vmem:[%s215 + $0x14] sm:$0xf] %v834
        %867 = vst [vmem:[%s215 + $0x18] sm:$0xf] %v835
        %868 = vst [vmem:[%s215 + $0x1c] sm:$0xf] %v836
        %869 = vst [vmem:[%s215 + $0x20] sm:$0xf] %v837
        %870 = vst [vmem:[%s215 + $0x24] sm:$0xf] %v838
        %871 = vst [vmem:[%s215 + $0x28] sm:$0xf] %v839
        %872 = vst [vmem:[%s215 + $0x2c] sm:$0xf] %v840
        %873 = vst [vmem:[%s215 + $0x30] sm:$0xf] %v841
        %874 = vst [vmem:[%s215 + $0x34] sm:$0xf] %v842
        %875 = vst [vmem:[%s215 + $0x38] sm:$0xf] %v843
        %876 = vst [vmem:[%s215 + $0x3c] sm:$0xf] %v844
        %s877 = sand.u32 %s97, 1
        %s878 = scalar_lea.sflag [#allocation4], %s877
        %s879 = sand.u32 %s97, 1
        %s880 = smul.addr %s879, 64
        %s881 = scalar_lea.vmem [#allocation8], %s880
        // Predicated region
        $region45: #{_lambda_.1} parent=31 // pred_check
          %p882 = pneg %p107
        $region46: #{_lambda_.1} parent=31 // pred_check_branch
          %884 = sbr.rel (%p882) target = $region48
        $region47: #{_lambda_.1} parent=31 // pred_region
          %s886 = ssub.s32 1024, 1024
          %887 = vsyncadd %s878, %s886
          %s888 = smul.addr %s21, 16
          %s889 = smul.addr %s888, 64
          %s890 = scalar_lea.hbm %s3, %s889
          %s891 = sshll.u32 %s881, 4
          %s892 = int_to_ptr.vmem [resolvable:$true] %s891
          %897 = dma.vmem_to_hbm [thread:$0]  %s892, 1024, %s890, %s878, 64, 64, 4
        $region48: #{_lambda_.1} parent=31 // pred_fallthru
          _
      $region32: #{_lambda_.1} parent=5 // pred_fallthru
        _
      %p898 = scmp.le.s32.totalorder 2, %s16
      // Predicated region
      $region49: #{_lambda_.1} parent=5 // pred_check
        %p899 = pneg %p898
      $region50: #{_lambda_.1} parent=5 // pred_check_branch
        %901 = sbr.rel (%p899) target = $region52
      $region51: #{_lambda_.1} parent=5 // pred_region
        %s902 = ssub.s32 %s16, 2
        // Predicated region
        $region53: #{_lambda_.1} parent=51 // pred_check
          %p903 = pneg %p113
        $region54: #{_lambda_.1} parent=51 // pred_check_branch
          %905 = sbr.rel (%p903) target = $region56
        $region55: #{_lambda_.1} parent=51 // pred_region
          %s906 = sand.u32 %s98, 1
          %s907 = scalar_lea.sflag [#allocation4], %s906
          %s908 = sand.u32 %s98, 1
          %s909 = smul.addr %s908, 64
          %s910 = scalar_lea.vmem [#allocation8], %s909
          %911 = dma.done %s907, 1024
        $region56: #{_lambda_.1} parent=51 // pred_fallthru
          _
      $region52: #{_lambda_.1} parent=5 // pred_fallthru
        _
    $region6: #{_lambda_.1} parent=1 // loop_footer
      %s20 = sadd.s32 1, %s16
    $region7: #{_lambda_.1} parent=1 // loop_footer_branch
      %15 = sbr.rel target = $region3
    $region8: #{_lambda_.1} parent=1 // loop_exit
      _
    %912 = vsyncpa [#allocation3], 1
    %s913 = scalar_lea.sflag [#allocation3], 1
    %914 = vsyncpa %s913, 1
    %915 = vsyncpa [#allocation6], 1
    %916 = vsyncpa [#allocation4], 1
    %s917 = scalar_lea.sflag [#allocation4], 1
    %918 = vsyncpa %s917, 1

</llo_original>
